<compile_context>
chip_gen: v7x
topology: tpu7x:2x2x1
jax: 0.10.0
libtpu: 0.0.40
codegen_flags: <defaults>
</compile_context>

<pallas_src>
import jax
import jax.numpy as jnp
from jax import lax
from jax.experimental import pallas as pl
from jax.experimental.pallas import tpu as pltpu


# ----------------------------- Pallas kernel --------------------------------

def _onehot_kernel(x_ref, o_ref):
    # x_ref: (1, S, 1) int32   -- token ids for one batch row, S on sublanes
    # o_ref: (1, S, C) float32 -- one-hot over classes 1..C (class 0 dropped)
    x = x_ref[0]                                                  # (S, 1)
    s = o_ref.shape[1]
    c = o_ref.shape[2]
    cls = lax.broadcasted_iota(jnp.int32, (s, c), 1) + 1          # class ids 1..C on lanes
    o_ref[0] = (x == cls).astype(o_ref.dtype)                     # VPU lane-broadcast compare


def onehot_embedding(x, word_number):
    """x: (B, S) integer token ids in [0, word_number).

    Returns (B, S, word_number - 1) float32, matching
    F.one_hot(x, word_number).float()[:, :, 1:].
    """
    B, S = x.shape
    C = word_number - 1
    # (B, S) -> (B, S, 1): pure metadata reshape; puts S on sublanes in the
    # kernel's VMEM tile so no in-kernel relayout is needed.
    x3 = x.astype(jnp.int32)[:, :, None]
    return pl.pallas_call(
        _onehot_kernel,
        out_shape=jax.ShapeDtypeStruct((B, S, C), jnp.float32),
        grid=(B,),
        in_specs=[pl.BlockSpec((1, S, 1), lambda b: (b, 0, 0))],
        out_specs=pl.BlockSpec((1, S, C), lambda b: (b, 0, 0)),
        compiler_params=pltpu.CompilerParams(
            dimension_semantics=("parallel",)),
    )(x3)


# --------------------------------- main --------------------------------------

if __name__ == "__main__":
    WORD_NUMBER = 21          # e.g. 20 amino acids + padding index 0
    B, S = 2, 512

    key = jax.random.PRNGKey(0)
    x = jax.random.randint(key, (B, S), 0, WORD_NUMBER, dtype=jnp.int32)

    fwd = jax.jit(onehot_embedding, static_argnums=1)
    out = fwd(x, WORD_NUMBER)
    jax.block_until_ready(out)

    # Reference: F.one_hot(x, W).float()[:, :, 1:]
    ref = jax.nn.one_hot(x, WORD_NUMBER, dtype=jnp.float32)[:, :, 1:]

    assert out.shape == (B, S, WORD_NUMBER - 1)
    assert out.dtype == jnp.float32
    assert bool(jnp.array_equal(out, ref))
    print("KERNEL_OK")
</pallas_src>

<mosaic_0001>
module attributes {stable_mosaic.version = 11 : i64} {
  func.func @_onehot_kernel(%arg0: i32, %arg1: memref<1x512x1xi32, #tpu.memory_space<vmem>>, %arg2: memref<1x512x20xf32, #tpu.memory_space<vmem>>) attributes {dimension_semantics = [#tpu.dimension_semantics<parallel>], iteration_bounds = array<i64: 2>, scalar_prefetch = 0 : i64, scratch_operands = 0 : i64, tpu.core_type = #tpu.core_type<tc>, window_params = [{transform_indices = @transform_0, window_bounds = array<i64: 1, 512, 1>}, {transform_indices = @transform_1, window_bounds = array<i64: 1, 512, 20>}]} {
    %c0 = arith.constant 0 : index
    %c0_0 = arith.constant 0 : index
    %c0_1 = arith.constant 0 : index
    %0 = vector.load %arg1[%c0, %c0_0, %c0_1] : memref<1x512x1xi32, #tpu.memory_space<vmem>>, vector<1x512x1xi32>
    %1 = vector.shape_cast %0 : vector<1x512x1xi32> to vector<512x1xi32>
    %2 = tpu.iota {dimensions = array<i32: 1>} : vector<512x20xi32>
    %c1_i32 = arith.constant 1 : i32
    %3 = vector.broadcast %c1_i32 : i32 to vector<512x20xi32>
    %4 = arith.addi %2, %3 : vector<512x20xi32>
    %5 = vector.broadcast %1 : vector<512x1xi32> to vector<512x20xi32>
    %6 = arith.cmpi eq, %5, %4 : vector<512x20xi32>
    %7 = arith.extui %6 : vector<512x20xi1> to vector<512x20xi32>
    %8 = arith.sitofp %7 : vector<512x20xi32> to vector<512x20xf32>
    %c0_2 = arith.constant 0 : index
    %c0_3 = arith.constant 0 : index
    %c0_4 = arith.constant 0 : index
    %9 = vector.load %arg2[%c0_2, %c0_3, %c0_4] : memref<1x512x20xf32, #tpu.memory_space<vmem>>, vector<1x512x20xf32>
    %10 = vector.shape_cast %9 : vector<1x512x20xf32> to vector<512x20xf32>
    %11 = vector.shape_cast %8 : vector<512x20xf32> to vector<1x512x20xf32>
    tpu.vector_store %arg2[%c0_2, %c0_3, %c0_4], %11 {strides = array<i32>} : memref<1x512x20xf32, #tpu.memory_space<vmem>>, vector<1x512x20xf32>,
    return
  }
  func.func @transform_0(%arg0: i32) -> (i32, i32, i32) {
    %c0_i32 = arith.constant 0 : i32
    %c0_i32_0 = arith.constant 0 : i32
    %c0_i32_1 = arith.constant 0 : i32
    return %arg0, %c0_i32, %c0_i32_0 : i32, i32, i32
  }
  func.func @transform_1(%arg0: i32) -> (i32, i32, i32) {
    %c0_i32 = arith.constant 0 : i32
    %c0_i32_0 = arith.constant 0 : i32
    %c0_i32_1 = arith.constant 0 : i32
    return %arg0, %c0_i32, %c0_i32_0 : i32, i32, i32
  }
}

</mosaic_0001>

<llo_original>
// kernel: onehot_embedding.1
$region0: #{onehot_embedding.1}
  #allocation0 [shape = 'u32[]', space=smem, size = 0x4, offset = 0x4, fixed_abs, tag = 'smem constant byte address 0x4 - core index']
  #allocation1 [shape = 'u32[144,128]{1,0:T(1,128)}', space=vmem, size = 0x12000, scoped, tag = 'internal scratch']
  %s0 = inlined_call_operand.vmem [shape: s32[2,512,1], index: 0, kind: input, shape index: {}]
  %s1 = inlined_call_operand.vmem [shape: f32[2,512,20], index: 1, kind: output, shape index: {}]
  %s2 = sld [smem:[#allocation0]]
  $region37: #{onehot_embedding.1} parent=0
    _
  %s4 = ssub.s32 1, %s2
  %s5 = scalar_select 0, %s4, %s2
  loop: start=0, step=1, limit=4
  $region2: #{onehot_embedding.1} parent=0 // loop_pre_header
    _
  $region3: #{onehot_embedding.1} parent=0 // loop_header
    %s7 = sphi 0, %s11
    %p8 = scmp.ge.s32.totalorder %s7, 4
    %s17 = sphi 0, %s19
    %s20 = sphi 0, %s17
    %s21 = sphi 0, %s20
    %s37 = sphi 0, %s21
    %s43 = sphi 0, %s45
    %s46 = sphi 0, %s43
    %s47 = sphi 0, %s46
    %s63 = sphi 0, %s47
  $region4: #{onehot_embedding.1} parent=0 // loop_header_branch
    %10 = sbr.rel (%p8) target = $region8
  $region5: #{onehot_embedding.1} parent=0 // loop_body
    %s12 = ssub.s32 %s7, 1
    %s13 = ssub.s32 %s7, 2
    %s14 = sadd.s32 %s7, 1
    %s15 = ssub.s32 %s7, %s14
    %p16 = scmp.eq.s32.totalorder %s15, 0
    %s18 = sadd.s32 %s17, 1
    %s19 = scalar_select %p16, %s17, %s18
    %p22 = pneg %p16
    %p23 = scmp.eq.s32.totalorder %s7, 1
    %p24 = por %p22, %p23
    %p25 = scmp.ne.s32.totalorder %s17, %s20
    %p26 = scmp.eq.s32.totalorder %s7, 0
    %p27 = por %p25, %p26
    %p28 = scmp.ne.s32.totalorder %s17, %s20
    %p29 = scmp.eq.s32.totalorder %s12, 1
    %p30 = por %p28, %p29
    %p31 = scmp.ne.s32.totalorder %s20, %s21
    %p32 = scmp.eq.s32.totalorder %s12, 0
    %p33 = por %p31, %p32
    %p34 = scmp.ne.s32.totalorder %s20, %s21
    %p35 = scmp.eq.s32.totalorder %s13, 1
    %p36 = por %p34, %p35
    %p38 = scmp.ne.s32.totalorder %s21, %s37
    %p39 = scmp.eq.s32.totalorder %s13, 0
    %p40 = por %p38, %p39
    %s41 = ssub.s32 %s7, %s14
    %p42 = scmp.eq.s32.totalorder %s41, 0
    %s44 = sadd.s32 %s43, 1
    %s45 = scalar_select %p42, %s43, %s44
    %p48 = pneg %p42
    %p49 = scmp.eq.s32.totalorder %s7, 1
    %p50 = por %p48, %p49
    %p51 = scmp.ne.s32.totalorder %s43, %s46
    %p52 = scmp.eq.s32.totalorder %s7, 0
    %p53 = por %p51, %p52
    %p54 = scmp.ne.s32.totalorder %s43, %s46
    %p55 = scmp.eq.s32.totalorder %s12, 1
    %p56 = por %p54, %p55
    %p57 = scmp.ne.s32.totalorder %s46, %s47
    %p58 = scmp.eq.s32.totalorder %s12, 0
    %p59 = por %p57, %p58
    %p60 = scmp.ne.s32.totalorder %s46, %s47
    %p61 = scmp.eq.s32.totalorder %s13, 1
    %p62 = por %p60, %p61
    %p64 = scmp.ne.s32.totalorder %s47, %s63
    %p65 = scmp.eq.s32.totalorder %s13, 0
    %p66 = por %p64, %p65
    %p67 = scmp.le.s32.totalorder 1, %s7
    %p68 = scmp.lt.s32.totalorder %s7, 3
    %p69 = pnand %p67, %p68
    %p70 = pneg %p69
    // Predicated region
    $region9: #{onehot_embedding.1} parent=5 // pred_check
      _
    $region10: #{onehot_embedding.1} parent=5 // pred_check_branch
      %72 = sbr.rel (%p69) target = $region12
    $region11: #{onehot_embedding.1} parent=5 // pred_region
      %s73 = ssub.s32 %s7, 1
    $region12: #{onehot_embedding.1} parent=5 // pred_fallthru
      _
    %p74 = scmp.lt.s32.totalorder %s7, 2
    // Predicated region
    $region13: #{onehot_embedding.1} parent=5 // pred_check
      %p75 = pneg %p74
    $region14: #{onehot_embedding.1} parent=5 // pred_check_branch
      %77 = sbr.rel (%p75) target = $region16
    $region15: #{onehot_embedding.1} parent=5 // pred_region
      // Predicated region
      $region17: #{onehot_embedding.1} parent=15 // pred_check
        %p78 = pneg %p27
      $region18: #{onehot_embedding.1} parent=15 // pred_check_branch
        %80 = sbr.rel (%p78) target = $region20
      $region19: #{onehot_embedding.1} parent=15 // pred_region
        %p81 = scmp.lt.s32.totalorder %s7, 1
        %s82 = scalar_select %p81, %s7, 1
        %s83 = smul.addr %s82, 64
        %s84 = smul.addr %s83, 8
        %s85 = scalar_lea.vmem %s0, %s84
      $region20: #{onehot_embedding.1} parent=15 // pred_fallthru
        _
    $region16: #{onehot_embedding.1} parent=5 // pred_fallthru
      _
    %p86 = scmp.le.s32.totalorder 1, %s7
    %p87 = scmp.lt.s32.totalorder %s7, 3
    %p88 = pnand %p86, %p87
    %p89 = pneg %p88
    // Predicated region
    $region21: #{onehot_embedding.1} parent=5 // pred_check
      _
    $region22: #{onehot_embedding.1} parent=5 // pred_check_branch
      %91 = sbr.rel (%p88) target = $region24
    $region23: #{onehot_embedding.1} parent=5 // pred_region
      %s92 = ssub.s32 %s7, 1
      %p93 = scmp.lt.s32.totalorder %s12, 1
      %s94 = scalar_select %p93, %s12, 1
      %s95 = smul.addr %s94, 64
      %s96 = smul.addr %s95, 8
      %s97 = scalar_lea.vmem %s0, %s96
      %p98 = pneg %p33
      %p99 = pneg %p30
      %p100 = pneg %p59
      %p101 = pneg %p56
      %p102 = scmp.lt.s32.totalorder %s12, 1
      %s103 = scalar_select %p102, %s12, 1
      %s104 = smul.addr %s103, 64
      %s105 = smul.addr %s104, 8
      %s106 = scalar_lea.vmem %s1, %s105
      %p107 = scmp.lt.s32.totalorder %s12, 1
      %s108 = scalar_select %p107, %s12, 1
      %s109 = smul.addr %s108, 64
      %s110 = smul.addr %s109, 8
      %s111 = scalar_lea.vmem %s0, %s110
      %p112 = scmp.lt.s32.totalorder %s12, 1
      %s113 = scalar_select %p112, %s12, 1
      %s114 = smul.addr %s113, 64
      %s115 = smul.addr %s114, 8
      %s116 = scalar_lea.vmem %s1, %s115
      %v117 = vld [vmem:[%s111] sm:$0xff]
      %v118 = vld [vmem:[%s111 + $0x8] sm:$0xff]
      %v119 = vld [vmem:[%s111 + $0x10] sm:$0xff]
      %v120 = vld [vmem:[%s111 + $0x18] sm:$0xff]
      %v121 = vld [vmem:[%s111 + $0x20] sm:$0xff]
      %v122 = vld [vmem:[%s111 + $0x28] sm:$0xff]
      %v123 = vld [vmem:[%s111 + $0x30] sm:$0xff]
      %v124 = vld [vmem:[%s111 + $0x38] sm:$0xff]
      %v125 = vld [vmem:[%s111 + $0x40] sm:$0xff]
      %v126 = vld [vmem:[%s111 + $0x48] sm:$0xff]
      %v127 = vld [vmem:[%s111 + $0x50] sm:$0xff]
      %v128 = vld [vmem:[%s111 + $0x58] sm:$0xff]
      %v129 = vld [vmem:[%s111 + $0x60] sm:$0xff]
      %v130 = vld [vmem:[%s111 + $0x68] sm:$0xff]
      %v131 = vld [vmem:[%s111 + $0x70] sm:$0xff]
      %v132 = vld [vmem:[%s111 + $0x78] sm:$0xff]
      %v133 = vld [vmem:[%s111 + $0x80] sm:$0xff]
      %v134 = vld [vmem:[%s111 + $0x88] sm:$0xff]
      %v135 = vld [vmem:[%s111 + $0x90] sm:$0xff]
      %v136 = vld [vmem:[%s111 + $0x98] sm:$0xff]
      %v137 = vld [vmem:[%s111 + $0xa0] sm:$0xff]
      %v138 = vld [vmem:[%s111 + $0xa8] sm:$0xff]
      %v139 = vld [vmem:[%s111 + $0xb0] sm:$0xff]
      %v140 = vld [vmem:[%s111 + $0xb8] sm:$0xff]
      %v141 = vld [vmem:[%s111 + $0xc0] sm:$0xff]
      %v142 = vld [vmem:[%s111 + $0xc8] sm:$0xff]
      %v143 = vld [vmem:[%s111 + $0xd0] sm:$0xff]
      %v144 = vld [vmem:[%s111 + $0xd8] sm:$0xff]
      %v145 = vld [vmem:[%s111 + $0xe0] sm:$0xff]
      %v146 = vld [vmem:[%s111 + $0xe8] sm:$0xff]
      %v147 = vld [vmem:[%s111 + $0xf0] sm:$0xff]
      %v148 = vld [vmem:[%s111 + $0xf8] sm:$0xff]
      %v149 = vld [vmem:[%s111 + $0x100] sm:$0xff]
      %v150 = vld [vmem:[%s111 + $0x108] sm:$0xff]
      %v151 = vld [vmem:[%s111 + $0x110] sm:$0xff]
      %v152 = vld [vmem:[%s111 + $0x118] sm:$0xff]
      %v153 = vld [vmem:[%s111 + $0x120] sm:$0xff]
      %v154 = vld [vmem:[%s111 + $0x128] sm:$0xff]
      %v155 = vld [vmem:[%s111 + $0x130] sm:$0xff]
      %v156 = vld [vmem:[%s111 + $0x138] sm:$0xff]
      %v157 = vld [vmem:[%s111 + $0x140] sm:$0xff]
      %v158 = vld [vmem:[%s111 + $0x148] sm:$0xff]
      %v159 = vld [vmem:[%s111 + $0x150] sm:$0xff]
      %v160 = vld [vmem:[%s111 + $0x158] sm:$0xff]
      %v161 = vld [vmem:[%s111 + $0x160] sm:$0xff]
      %v162 = vld [vmem:[%s111 + $0x168] sm:$0xff]
      %v163 = vld [vmem:[%s111 + $0x170] sm:$0xff]
      %v164 = vld [vmem:[%s111 + $0x178] sm:$0xff]
      %v165 = vld [vmem:[%s111 + $0x180] sm:$0xff]
      %v166 = vld [vmem:[%s111 + $0x188] sm:$0xff]
      %v167 = vld [vmem:[%s111 + $0x190] sm:$0xff]
      %v168 = vld [vmem:[%s111 + $0x198] sm:$0xff]
      %v169 = vld [vmem:[%s111 + $0x1a0] sm:$0xff]
      %v170 = vld [vmem:[%s111 + $0x1a8] sm:$0xff]
      %v171 = vld [vmem:[%s111 + $0x1b0] sm:$0xff]
      %v172 = vld [vmem:[%s111 + $0x1b8] sm:$0xff]
      %v173 = vld [vmem:[%s111 + $0x1c0] sm:$0xff]
      %v174 = vld [vmem:[%s111 + $0x1c8] sm:$0xff]
      %v175 = vld [vmem:[%s111 + $0x1d0] sm:$0xff]
      %v176 = vld [vmem:[%s111 + $0x1d8] sm:$0xff]
      %v177 = vld [vmem:[%s111 + $0x1e0] sm:$0xff]
      %v178 = vld [vmem:[%s111 + $0x1e8] sm:$0xff]
      %v179 = vld [vmem:[%s111 + $0x1f0] sm:$0xff]
      %v180 = vld [vmem:[%s111 + $0x1f8] sm:$0xff]
      %v181 = vlaneseq
      %v182 = vand.u32 %v181, 127
      %v183 = vadd.s32 %v182, 1
      %184 = vset.pattern.permute.xlu0 0
      %185 = vperm.xlu0 %184, %v117
      %v186 = vpop.permute.xlu0 %185
      %187 = vset.pattern.permute.xlu0 0
      %188 = vperm.xlu0 %187, %v118
      %v189 = vpop.permute.xlu0 %188
      %190 = vset.pattern.permute.xlu0 0
      %191 = vperm.xlu0 %190, %v119
      %v192 = vpop.permute.xlu0 %191
      %193 = vset.pattern.permute.xlu0 0
      %194 = vperm.xlu0 %193, %v120
      %v195 = vpop.permute.xlu0 %194
      %196 = vset.pattern.permute.xlu0 0
      %197 = vperm.xlu0 %196, %v121
      %v198 = vpop.permute.xlu0 %197
      %199 = vset.pattern.permute.xlu0 0
      %200 = vperm.xlu0 %199, %v122
      %v201 = vpop.permute.xlu0 %200
      %202 = vset.pattern.permute.xlu0 0
      %203 = vperm.xlu0 %202, %v123
      %v204 = vpop.permute.xlu0 %203
      %205 = vset.pattern.permute.xlu0 0
      %206 = vperm.xlu0 %205, %v124
      %v207 = vpop.permute.xlu0 %206
      %208 = vset.pattern.permute.xlu0 0
      %209 = vperm.xlu0 %208, %v125
      %v210 = vpop.permute.xlu0 %209
      %211 = vset.pattern.permute.xlu0 0
      %212 = vperm.xlu0 %211, %v126
      %v213 = vpop.permute.xlu0 %212
      %214 = vset.pattern.permute.xlu0 0
      %215 = vperm.xlu0 %214, %v127
      %v216 = vpop.permute.xlu0 %215
      %217 = vset.pattern.permute.xlu0 0
      %218 = vperm.xlu0 %217, %v128
      %v219 = vpop.permute.xlu0 %218
      %220 = vset.pattern.permute.xlu0 0
      %221 = vperm.xlu0 %220, %v129
      %v222 = vpop.permute.xlu0 %221
      %223 = vset.pattern.permute.xlu0 0
      %224 = vperm.xlu0 %223, %v130
      %v225 = vpop.permute.xlu0 %224
      %226 = vset.pattern.permute.xlu0 0
      %227 = vperm.xlu0 %226, %v131
      %v228 = vpop.permute.xlu0 %227
      %229 = vset.pattern.permute.xlu0 0
      %230 = vperm.xlu0 %229, %v132
      %v231 = vpop.permute.xlu0 %230
      %232 = vset.pattern.permute.xlu0 0
      %233 = vperm.xlu0 %232, %v133
      %v234 = vpop.permute.xlu0 %233
      %235 = vset.pattern.permute.xlu0 0
      %236 = vperm.xlu0 %235, %v134
      %v237 = vpop.permute.xlu0 %236
      %238 = vset.pattern.permute.xlu0 0
      %239 = vperm.xlu0 %238, %v135
      %v240 = vpop.permute.xlu0 %239
      %241 = vset.pattern.permute.xlu0 0
      %242 = vperm.xlu0 %241, %v136
      %v243 = vpop.permute.xlu0 %242
      %244 = vset.pattern.permute.xlu0 0
      %245 = vperm.xlu0 %244, %v137
      %v246 = vpop.permute.xlu0 %245
      %247 = vset.pattern.permute.xlu0 0
      %248 = vperm.xlu0 %247, %v138
      %v249 = vpop.permute.xlu0 %248
      %250 = vset.pattern.permute.xlu0 0
      %251 = vperm.xlu0 %250, %v139
      %v252 = vpop.permute.xlu0 %251
      %253 = vset.pattern.permute.xlu0 0
      %254 = vperm.xlu0 %253, %v140
      %v255 = vpop.permute.xlu0 %254
      %256 = vset.pattern.permute.xlu0 0
      %257 = vperm.xlu0 %256, %v141
      %v258 = vpop.permute.xlu0 %257
      %259 = vset.pattern.permute.xlu0 0
      %260 = vperm.xlu0 %259, %v142
      %v261 = vpop.permute.xlu0 %260
      %262 = vset.pattern.permute.xlu0 0
      %263 = vperm.xlu0 %262, %v143
      %v264 = vpop.permute.xlu0 %263
      %265 = vset.pattern.permute.xlu0 0
      %266 = vperm.xlu0 %265, %v144
      %v267 = vpop.permute.xlu0 %266
      %268 = vset.pattern.permute.xlu0 0
      %269 = vperm.xlu0 %268, %v145
      %v270 = vpop.permute.xlu0 %269
      %271 = vset.pattern.permute.xlu0 0
      %272 = vperm.xlu0 %271, %v146
      %v273 = vpop.permute.xlu0 %272
      %274 = vset.pattern.permute.xlu0 0
      %275 = vperm.xlu0 %274, %v147
      %v276 = vpop.permute.xlu0 %275
      %277 = vset.pattern.permute.xlu0 0
      %278 = vperm.xlu0 %277, %v148
      %v279 = vpop.permute.xlu0 %278
      %280 = vset.pattern.permute.xlu0 0
      %281 = vperm.xlu0 %280, %v149
      %v282 = vpop.permute.xlu0 %281
      %283 = vset.pattern.permute.xlu0 0
      %284 = vperm.xlu0 %283, %v150
      %v285 = vpop.permute.xlu0 %284
      %286 = vset.pattern.permute.xlu0 0
      %287 = vperm.xlu0 %286, %v151
      %v288 = vpop.permute.xlu0 %287
      %289 = vset.pattern.permute.xlu0 0
      %290 = vperm.xlu0 %289, %v152
      %v291 = vpop.permute.xlu0 %290
      %292 = vset.pattern.permute.xlu0 0
      %293 = vperm.xlu0 %292, %v153
      %v294 = vpop.permute.xlu0 %293
      %295 = vset.pattern.permute.xlu0 0
      %296 = vperm.xlu0 %295, %v154
      %v297 = vpop.permute.xlu0 %296
      %298 = vset.pattern.permute.xlu0 0
      %299 = vperm.xlu0 %298, %v155
      %v300 = vpop.permute.xlu0 %299
      %301 = vset.pattern.permute.xlu0 0
      %302 = vperm.xlu0 %301, %v156
      %v303 = vpop.permute.xlu0 %302
      %304 = vset.pattern.permute.xlu0 0
      %305 = vperm.xlu0 %304, %v157
      %v306 = vpop.permute.xlu0 %305
      %307 = vset.pattern.permute.xlu0 0
      %308 = vperm.xlu0 %307, %v158
      %v309 = vpop.permute.xlu0 %308
      %310 = vset.pattern.permute.xlu0 0
      %311 = vperm.xlu0 %310, %v159
      %v312 = vpop.permute.xlu0 %311
      %313 = vset.pattern.permute.xlu0 0
      %314 = vperm.xlu0 %313, %v160
      %v315 = vpop.permute.xlu0 %314
      %316 = vset.pattern.permute.xlu0 0
      %317 = vperm.xlu0 %316, %v161
      %v318 = vpop.permute.xlu0 %317
      %319 = vset.pattern.permute.xlu0 0
      %320 = vperm.xlu0 %319, %v162
      %v321 = vpop.permute.xlu0 %320
      %322 = vset.pattern.permute.xlu0 0
      %323 = vperm.xlu0 %322, %v163
      %v324 = vpop.permute.xlu0 %323
      %325 = vset.pattern.permute.xlu0 0
      %326 = vperm.xlu0 %325, %v164
      %v327 = vpop.permute.xlu0 %326
      %328 = vset.pattern.permute.xlu0 0
      %329 = vperm.xlu0 %328, %v165
      %v330 = vpop.permute.xlu0 %329
      %331 = vset.pattern.permute.xlu0 0
      %332 = vperm.xlu0 %331, %v166
      %v333 = vpop.permute.xlu0 %332
      %334 = vset.pattern.permute.xlu0 0
      %335 = vperm.xlu0 %334, %v167
      %v336 = vpop.permute.xlu0 %335
      %337 = vset.pattern.permute.xlu0 0
      %338 = vperm.xlu0 %337, %v168
      %v339 = vpop.permute.xlu0 %338
      %340 = vset.pattern.permute.xlu0 0
      %341 = vperm.xlu0 %340, %v169
      %v342 = vpop.permute.xlu0 %341
      %343 = vset.pattern.permute.xlu0 0
      %344 = vperm.xlu0 %343, %v170
      %v345 = vpop.permute.xlu0 %344
      %346 = vset.pattern.permute.xlu0 0
      %347 = vperm.xlu0 %346, %v171
      %v348 = vpop.permute.xlu0 %347
      %349 = vset.pattern.permute.xlu0 0
      %350 = vperm.xlu0 %349, %v172
      %v351 = vpop.permute.xlu0 %350
      %352 = vset.pattern.permute.xlu0 0
      %353 = vperm.xlu0 %352, %v173
      %v354 = vpop.permute.xlu0 %353
      %355 = vset.pattern.permute.xlu0 0
      %356 = vperm.xlu0 %355, %v174
      %v357 = vpop.permute.xlu0 %356
      %358 = vset.pattern.permute.xlu0 0
      %359 = vperm.xlu0 %358, %v175
      %v360 = vpop.permute.xlu0 %359
      %361 = vset.pattern.permute.xlu0 0
      %362 = vperm.xlu0 %361, %v176
      %v363 = vpop.permute.xlu0 %362
      %364 = vset.pattern.permute.xlu0 0
      %365 = vperm.xlu0 %364, %v177
      %v366 = vpop.permute.xlu0 %365
      %367 = vset.pattern.permute.xlu0 0
      %368 = vperm.xlu0 %367, %v178
      %v369 = vpop.permute.xlu0 %368
      %370 = vset.pattern.permute.xlu0 0
      %371 = vperm.xlu0 %370, %v179
      %v372 = vpop.permute.xlu0 %371
      %373 = vset.pattern.permute.xlu0 0
      %374 = vperm.xlu0 %373, %v180
      %v375 = vpop.permute.xlu0 %374
      %vm376 = vcmp.eq.s32.totalorder %v186, %v183
      %vm377 = vcmp.eq.s32.totalorder %v189, %v183
      %vm378 = vcmp.eq.s32.totalorder %v192, %v183
      %vm379 = vcmp.eq.s32.totalorder %v195, %v183
      %vm380 = vcmp.eq.s32.totalorder %v198, %v183
      %vm381 = vcmp.eq.s32.totalorder %v201, %v183
      %vm382 = vcmp.eq.s32.totalorder %v204, %v183
      %vm383 = vcmp.eq.s32.totalorder %v207, %v183
      %vm384 = vcmp.eq.s32.totalorder %v210, %v183
      %vm385 = vcmp.eq.s32.totalorder %v213, %v183
      %vm386 = vcmp.eq.s32.totalorder %v216, %v183
      %vm387 = vcmp.eq.s32.totalorder %v219, %v183
      %vm388 = vcmp.eq.s32.totalorder %v222, %v183
      %vm389 = vcmp.eq.s32.totalorder %v225, %v183
      %vm390 = vcmp.eq.s32.totalorder %v228, %v183
      %vm391 = vcmp.eq.s32.totalorder %v231, %v183
      %vm392 = vcmp.eq.s32.totalorder %v234, %v183
      %vm393 = vcmp.eq.s32.totalorder %v237, %v183
      %vm394 = vcmp.eq.s32.totalorder %v240, %v183
      %vm395 = vcmp.eq.s32.totalorder %v243, %v183
      %vm396 = vcmp.eq.s32.totalorder %v246, %v183
      %vm397 = vcmp.eq.s32.totalorder %v249, %v183
      %vm398 = vcmp.eq.s32.totalorder %v252, %v183
      %vm399 = vcmp.eq.s32.totalorder %v255, %v183
      %vm400 = vcmp.eq.s32.totalorder %v258, %v183
      %vm401 = vcmp.eq.s32.totalorder %v261, %v183
      %vm402 = vcmp.eq.s32.totalorder %v264, %v183
      %vm403 = vcmp.eq.s32.totalorder %v267, %v183
      %vm404 = vcmp.eq.s32.totalorder %v270, %v183
      %vm405 = vcmp.eq.s32.totalorder %v273, %v183
      %vm406 = vcmp.eq.s32.totalorder %v276, %v183
      %vm407 = vcmp.eq.s32.totalorder %v279, %v183
      %vm408 = vcmp.eq.s32.totalorder %v282, %v183
      %vm409 = vcmp.eq.s32.totalorder %v285, %v183
      %vm410 = vcmp.eq.s32.totalorder %v288, %v183
      %vm411 = vcmp.eq.s32.totalorder %v291, %v183
      %vm412 = vcmp.eq.s32.totalorder %v294, %v183
      %vm413 = vcmp.eq.s32.totalorder %v297, %v183
      %vm414 = vcmp.eq.s32.totalorder %v300, %v183
      %vm415 = vcmp.eq.s32.totalorder %v303, %v183
      %vm416 = vcmp.eq.s32.totalorder %v306, %v183
      %vm417 = vcmp.eq.s32.totalorder %v309, %v183
      %vm418 = vcmp.eq.s32.totalorder %v312, %v183
      %vm419 = vcmp.eq.s32.totalorder %v315, %v183
      %vm420 = vcmp.eq.s32.totalorder %v318, %v183
      %vm421 = vcmp.eq.s32.totalorder %v321, %v183
      %vm422 = vcmp.eq.s32.totalorder %v324, %v183
      %vm423 = vcmp.eq.s32.totalorder %v327, %v183
      %vm424 = vcmp.eq.s32.totalorder %v330, %v183
      %vm425 = vcmp.eq.s32.totalorder %v333, %v183
      %vm426 = vcmp.eq.s32.totalorder %v336, %v183
      %vm427 = vcmp.eq.s32.totalorder %v339, %v183
      %vm428 = vcmp.eq.s32.totalorder %v342, %v183
      %vm429 = vcmp.eq.s32.totalorder %v345, %v183
      %vm430 = vcmp.eq.s32.totalorder %v348, %v183
      %vm431 = vcmp.eq.s32.totalorder %v351, %v183
      %vm432 = vcmp.eq.s32.totalorder %v354, %v183
      %vm433 = vcmp.eq.s32.totalorder %v357, %v183
      %vm434 = vcmp.eq.s32.totalorder %v360, %v183
      %vm435 = vcmp.eq.s32.totalorder %v363, %v183
      %vm436 = vcmp.eq.s32.totalorder %v366, %v183
      %vm437 = vcmp.eq.s32.totalorder %v369, %v183
      %vm438 = vcmp.eq.s32.totalorder %v372, %v183
      %vm439 = vcmp.eq.s32.totalorder %v375, %v183
      %v440 = vsel %vm376, 1, 0
      %v441 = vsel %vm377, 1, 0
      %v442 = vsel %vm378, 1, 0
      %v443 = vsel %vm379, 1, 0
      %v444 = vsel %vm380, 1, 0
      %v445 = vsel %vm381, 1, 0
      %v446 = vsel %vm382, 1, 0
      %v447 = vsel %vm383, 1, 0
      %v448 = vsel %vm384, 1, 0
      %v449 = vsel %vm385, 1, 0
      %v450 = vsel %vm386, 1, 0
      %v451 = vsel %vm387, 1, 0
      %v452 = vsel %vm388, 1, 0
      %v453 = vsel %vm389, 1, 0
      %v454 = vsel %vm390, 1, 0
      %v455 = vsel %vm391, 1, 0
      %v456 = vsel %vm392, 1, 0
      %v457 = vsel %vm393, 1, 0
      %v458 = vsel %vm394, 1, 0
      %v459 = vsel %vm395, 1, 0
      %v460 = vsel %vm396, 1, 0
      %v461 = vsel %vm397, 1, 0
      %v462 = vsel %vm398, 1, 0
      %v463 = vsel %vm399, 1, 0
      %v464 = vsel %vm400, 1, 0
      %v465 = vsel %vm401, 1, 0
      %v466 = vsel %vm402, 1, 0
      %v467 = vsel %vm403, 1, 0
      %v468 = vsel %vm404, 1, 0
      %v469 = vsel %vm405, 1, 0
      %v470 = vsel %vm406, 1, 0
      %v471 = vsel %vm407, 1, 0
      %v472 = vsel %vm408, 1, 0
      %v473 = vsel %vm409, 1, 0
      %v474 = vsel %vm410, 1, 0
      %v475 = vsel %vm411, 1, 0
      %v476 = vsel %vm412, 1, 0
      %v477 = vsel %vm413, 1, 0
      %v478 = vsel %vm414, 1, 0
      %v479 = vsel %vm415, 1, 0
      %v480 = vsel %vm416, 1, 0
      %v481 = vsel %vm417, 1, 0
      %v482 = vsel %vm418, 1, 0
      %v483 = vsel %vm419, 1, 0
      %v484 = vsel %vm420, 1, 0
      %v485 = vsel %vm421, 1, 0
      %v486 = vsel %vm422, 1, 0
      %v487 = vsel %vm423, 1, 0
      %v488 = vsel %vm424, 1, 0
      %v489 = vsel %vm425, 1, 0
      %v490 = vsel %vm426, 1, 0
      %v491 = vsel %vm427, 1, 0
      %v492 = vsel %vm428, 1, 0
      %v493 = vsel %vm429, 1, 0
      %v494 = vsel %vm430, 1, 0
      %v495 = vsel %vm431, 1, 0
      %v496 = vsel %vm432, 1, 0
      %v497 = vsel %vm433, 1, 0
      %v498 = vsel %vm434, 1, 0
      %v499 = vsel %vm435, 1, 0
      %v500 = vsel %vm436, 1, 0
      %v501 = vsel %vm437, 1, 0
      %v502 = vsel %vm438, 1, 0
      %v503 = vsel %vm439, 1, 0
      %v504 = vcvt.s32.f32 %v440
      %v505 = vcvt.s32.f32 %v441
      %v506 = vcvt.s32.f32 %v442
      %v507 = vcvt.s32.f32 %v443
      %v508 = vcvt.s32.f32 %v444
      %v509 = vcvt.s32.f32 %v445
      %v510 = vcvt.s32.f32 %v446
      %v511 = vcvt.s32.f32 %v447
      %v512 = vcvt.s32.f32 %v448
      %v513 = vcvt.s32.f32 %v449
      %v514 = vcvt.s32.f32 %v450
      %v515 = vcvt.s32.f32 %v451
      %v516 = vcvt.s32.f32 %v452
      %v517 = vcvt.s32.f32 %v453
      %v518 = vcvt.s32.f32 %v454
      %v519 = vcvt.s32.f32 %v455
      %v520 = vcvt.s32.f32 %v456
      %v521 = vcvt.s32.f32 %v457
      %v522 = vcvt.s32.f32 %v458
      %v523 = vcvt.s32.f32 %v459
      %v524 = vcvt.s32.f32 %v460
      %v525 = vcvt.s32.f32 %v461
      %v526 = vcvt.s32.f32 %v462
      %v527 = vcvt.s32.f32 %v463
      %v528 = vcvt.s32.f32 %v464
      %v529 = vcvt.s32.f32 %v465
      %v530 = vcvt.s32.f32 %v466
      %v531 = vcvt.s32.f32 %v467
      %v532 = vcvt.s32.f32 %v468
      %v533 = vcvt.s32.f32 %v469
      %v534 = vcvt.s32.f32 %v470
      %v535 = vcvt.s32.f32 %v471
      %v536 = vcvt.s32.f32 %v472
      %v537 = vcvt.s32.f32 %v473
      %v538 = vcvt.s32.f32 %v474
      %v539 = vcvt.s32.f32 %v475
      %v540 = vcvt.s32.f32 %v476
      %v541 = vcvt.s32.f32 %v477
      %v542 = vcvt.s32.f32 %v478
      %v543 = vcvt.s32.f32 %v479
      %v544 = vcvt.s32.f32 %v480
      %v545 = vcvt.s32.f32 %v481
      %v546 = vcvt.s32.f32 %v482
      %v547 = vcvt.s32.f32 %v483
      %v548 = vcvt.s32.f32 %v484
      %v549 = vcvt.s32.f32 %v485
      %v550 = vcvt.s32.f32 %v486
      %v551 = vcvt.s32.f32 %v487
      %v552 = vcvt.s32.f32 %v488
      %v553 = vcvt.s32.f32 %v489
      %v554 = vcvt.s32.f32 %v490
      %v555 = vcvt.s32.f32 %v491
      %v556 = vcvt.s32.f32 %v492
      %v557 = vcvt.s32.f32 %v493
      %v558 = vcvt.s32.f32 %v494
      %v559 = vcvt.s32.f32 %v495
      %v560 = vcvt.s32.f32 %v496
      %v561 = vcvt.s32.f32 %v497
      %v562 = vcvt.s32.f32 %v498
      %v563 = vcvt.s32.f32 %v499
      %v564 = vcvt.s32.f32 %v500
      %v565 = vcvt.s32.f32 %v501
      %v566 = vcvt.s32.f32 %v502
      %v567 = vcvt.s32.f32 %v503
      %vm568 = vcmask 162816
      %569 = vst.msk [vmem:[%s116] sm:$0xff] %vm568, %v504
      %570 = vst.msk [vmem:[%s116 + $0x8] sm:$0xff] %vm568, %v505
      %571 = vst.msk [vmem:[%s116 + $0x10] sm:$0xff] %vm568, %v506
      %572 = vst.msk [vmem:[%s116 + $0x18] sm:$0xff] %vm568, %v507
      %573 = vst.msk [vmem:[%s116 + $0x20] sm:$0xff] %vm568, %v508
      %574 = vst.msk [vmem:[%s116 + $0x28] sm:$0xff] %vm568, %v509
      %575 = vst.msk [vmem:[%s116 + $0x30] sm:$0xff] %vm568, %v510
      %576 = vst.msk [vmem:[%s116 + $0x38] sm:$0xff] %vm568, %v511
      %577 = vst.msk [vmem:[%s116 + $0x40] sm:$0xff] %vm568, %v512
      %578 = vst.msk [vmem:[%s116 + $0x48] sm:$0xff] %vm568, %v513
      %579 = vst.msk [vmem:[%s116 + $0x50] sm:$0xff] %vm568, %v514
      %580 = vst.msk [vmem:[%s116 + $0x58] sm:$0xff] %vm568, %v515
      %581 = vst.msk [vmem:[%s116 + $0x60] sm:$0xff] %vm568, %v516
      %582 = vst.msk [vmem:[%s116 + $0x68] sm:$0xff] %vm568, %v517
      %583 = vst.msk [vmem:[%s116 + $0x70] sm:$0xff] %vm568, %v518
      %584 = vst.msk [vmem:[%s116 + $0x78] sm:$0xff] %vm568, %v519
      %585 = vst.msk [vmem:[%s116 + $0x80] sm:$0xff] %vm568, %v520
      %586 = vst.msk [vmem:[%s116 + $0x88] sm:$0xff] %vm568, %v521
      %587 = vst.msk [vmem:[%s116 + $0x90] sm:$0xff] %vm568, %v522
      %588 = vst.msk [vmem:[%s116 + $0x98] sm:$0xff] %vm568, %v523
      %589 = vst.msk [vmem:[%s116 + $0xa0] sm:$0xff] %vm568, %v524
      %590 = vst.msk [vmem:[%s116 + $0xa8] sm:$0xff] %vm568, %v525
      %591 = vst.msk [vmem:[%s116 + $0xb0] sm:$0xff] %vm568, %v526
      %592 = vst.msk [vmem:[%s116 + $0xb8] sm:$0xff] %vm568, %v527
      %593 = vst.msk [vmem:[%s116 + $0xc0] sm:$0xff] %vm568, %v528
      %594 = vst.msk [vmem:[%s116 + $0xc8] sm:$0xff] %vm568, %v529
      %595 = vst.msk [vmem:[%s116 + $0xd0] sm:$0xff] %vm568, %v530
      %596 = vst.msk [vmem:[%s116 + $0xd8] sm:$0xff] %vm568, %v531
      %597 = vst.msk [vmem:[%s116 + $0xe0] sm:$0xff] %vm568, %v532
      %598 = vst.msk [vmem:[%s116 + $0xe8] sm:$0xff] %vm568, %v533
      %599 = vst.msk [vmem:[%s116 + $0xf0] sm:$0xff] %vm568, %v534
      %600 = vst.msk [vmem:[%s116 + $0xf8] sm:$0xff] %vm568, %v535
      %601 = vst.msk [vmem:[%s116 + $0x100] sm:$0xff] %vm568, %v536
      %602 = vst.msk [vmem:[%s116 + $0x108] sm:$0xff] %vm568, %v537
      %603 = vst.msk [vmem:[%s116 + $0x110] sm:$0xff] %vm568, %v538
      %604 = vst.msk [vmem:[%s116 + $0x118] sm:$0xff] %vm568, %v539
      %605 = vst.msk [vmem:[%s116 + $0x120] sm:$0xff] %vm568, %v540
      %606 = vst.msk [vmem:[%s116 + $0x128] sm:$0xff] %vm568, %v541
      %607 = vst.msk [vmem:[%s116 + $0x130] sm:$0xff] %vm568, %v542
      %608 = vst.msk [vmem:[%s116 + $0x138] sm:$0xff] %vm568, %v543
      %609 = vst.msk [vmem:[%s116 + $0x140] sm:$0xff] %vm568, %v544
      %610 = vst.msk [vmem:[%s116 + $0x148] sm:$0xff] %vm568, %v545
      %611 = vst.msk [vmem:[%s116 + $0x150] sm:$0xff] %vm568, %v546
      %612 = vst.msk [vmem:[%s116 + $0x158] sm:$0xff] %vm568, %v547
      %613 = vst.msk [vmem:[%s116 + $0x160] sm:$0xff] %vm568, %v548
      %614 = vst.msk [vmem:[%s116 + $0x168] sm:$0xff] %vm568, %v549
      %615 = vst.msk [vmem:[%s116 + $0x170] sm:$0xff] %vm568, %v550
      %616 = vst.msk [vmem:[%s116 + $0x178] sm:$0xff] %vm568, %v551
      %617 = vst.msk [vmem:[%s116 + $0x180] sm:$0xff] %vm568, %v552
      %618 = vst.msk [vmem:[%s116 + $0x188] sm:$0xff] %vm568, %v553
      %619 = vst.msk [vmem:[%s116 + $0x190] sm:$0xff] %vm568, %v554
      %620 = vst.msk [vmem:[%s116 + $0x198] sm:$0xff] %vm568, %v555
      %621 = vst.msk [vmem:[%s116 + $0x1a0] sm:$0xff] %vm568, %v556
      %622 = vst.msk [vmem:[%s116 + $0x1a8] sm:$0xff] %vm568, %v557
      %623 = vst.msk [vmem:[%s116 + $0x1b0] sm:$0xff] %vm568, %v558
      %624 = vst.msk [vmem:[%s116 + $0x1b8] sm:$0xff] %vm568, %v559
      %625 = vst.msk [vmem:[%s116 + $0x1c0] sm:$0xff] %vm568, %v560
      %626 = vst.msk [vmem:[%s116 + $0x1c8] sm:$0xff] %vm568, %v561
      %627 = vst.msk [vmem:[%s116 + $0x1d0] sm:$0xff] %vm568, %v562
      %628 = vst.msk [vmem:[%s116 + $0x1d8] sm:$0xff] %vm568, %v563
      %629 = vst.msk [vmem:[%s116 + $0x1e0] sm:$0xff] %vm568, %v564
      %630 = vst.msk [vmem:[%s116 + $0x1e8] sm:$0xff] %vm568, %v565
      %631 = vst.msk [vmem:[%s116 + $0x1f0] sm:$0xff] %vm568, %v566
      %632 = vst.msk [vmem:[%s116 + $0x1f8] sm:$0xff] %vm568, %v567
      %p633 = scmp.lt.s32.totalorder %s12, 1
      %s634 = scalar_select %p633, %s12, 1
      %s635 = smul.addr %s634, 64
      %s636 = smul.addr %s635, 8
      %s637 = scalar_lea.vmem %s1, %s636
      // Predicated region
      $region25: #{onehot_embedding.1} parent=23 // pred_check
        %p638 = pneg %p56
      $region26: #{onehot_embedding.1} parent=23 // pred_check_branch
        %640 = sbr.rel (%p638) target = $region28
      $region27: #{onehot_embedding.1} parent=23 // pred_region
        _
      $region28: #{onehot_embedding.1} parent=23 // pred_fallthru
        _
    $region24: #{onehot_embedding.1} parent=5 // pred_fallthru
      _
    %p641 = scmp.le.s32.totalorder 2, %s7
    // Predicated region
    $region29: #{onehot_embedding.1} parent=5 // pred_check
      %p642 = pneg %p641
    $region30: #{onehot_embedding.1} parent=5 // pred_check_branch
      %644 = sbr.rel (%p642) target = $region32
    $region31: #{onehot_embedding.1} parent=5 // pred_region
      %s645 = ssub.s32 %s7, 2
      // Predicated region
      $region33: #{onehot_embedding.1} parent=31 // pred_check
        %p646 = pneg %p62
      $region34: #{onehot_embedding.1} parent=31 // pred_check_branch
        %648 = sbr.rel (%p646) target = $region36
      $region35: #{onehot_embedding.1} parent=31 // pred_region
        %p649 = scmp.lt.s32.totalorder %s13, 1
        %s650 = scalar_select %p649, %s13, 1
        %s651 = smul.addr %s650, 64
        %s652 = smul.addr %s651, 8
        %s653 = scalar_lea.vmem %s1, %s652
      $region36: #{onehot_embedding.1} parent=31 // pred_fallthru
        _
    $region32: #{onehot_embedding.1} parent=5 // pred_fallthru
      _
  $region6: #{onehot_embedding.1} parent=0 // loop_footer
    %s11 = sadd.s32 1, %s7
  $region7: #{onehot_embedding.1} parent=0 // loop_footer_branch
    %6 = sbr.rel target = $region3
  $region8: #{onehot_embedding.1} parent=0 // loop_exit
    _

</llo_original>
